<compile_context>
chip_gen: v6e
topology: v6e:2x2x1
jax: 0.10.0
libtpu: 0.0.40
codegen_flags: <defaults>
</compile_context>

<pallas_src>
import functools

import jax
import jax.numpy as jnp
from jax.experimental import pallas as pl
from jax.experimental.pallas import tpu as pltpu


def layernorm_kernel(x_ref, w_ref, b_ref, o_ref, *, d_model):
    # x_ref: (tile_rows, d_model); w_ref/b_ref: (1, d_model) f32 (constant index_map ->
    # VMEM-resident across grid steps, no re-DMA).
    x = x_ref[...].astype(jnp.float32)

    # mean via sum * const (no per-row divide); fold 1/(d-1) into the rsqrt argument so the
    # only per-row "expensive" op is the EUP rsqrt (separate bundle slot, effectively free).
    inv_d = jnp.float32(1.0 / d_model)
    inv_dm1 = jnp.float32(1.0 / (d_model - 1))
    mean = jnp.sum(x, axis=-1, keepdims=True) * inv_d
    xc = x - mean
    sumsq = jnp.sum(xc * xc, axis=-1, keepdims=True)
    # NOTE: torch.Tensor.std() is the *unbiased* estimator (ddof=1), no eps — matches the
    # reference module exactly (this is NOT nn.LayerNorm).
    inv_std = jax.lax.rsqrt(sumsq * inv_dm1)

    o_ref[...] = (w_ref[...] * (xc * inv_std) + b_ref[...]).astype(o_ref.dtype)


def _sublane_multiple(dtype) -> int:
    # Sub-32-bit dtypes pack along sublanes: 8 rows for 4-byte, 16 for 2-byte, 32 for 1-byte.
    return max(8, 32 // jnp.dtype(dtype).itemsize)


def _vmem_capacity_bytes() -> int:
    try:
        info = pltpu.get_tpu_info()
        cap = getattr(info, "vmem_capacity_bytes", None)
        if cap:
            return int(cap)
    except Exception:
        pass
    return 64 * 1024 * 1024  # conservative: v7x per-TC VMEM


def layer_norm(x, weight, bias, *, tile_rows=None):
    """x: (batch, position, d_model); weight/bias: (d_model,)."""
    b, s, d = x.shape
    rows = b * s
    itemsize = jnp.dtype(x.dtype).itemsize
    sub = _sublane_multiple(x.dtype)

    # --- tile sizing: bytes, not rows -------------------------------------------------
    # Working set per tile: double-buffered input + output tiles (2 * 2 * tile * itemsize)
    # plus the f32 intermediates the centered two-pass keeps live (x_f32 and xc ~ 2 * tile * 4).
    vmem_cap = _vmem_capacity_bytes()
    big_vmem = vmem_cap >= 100 * 1024 * 1024  # v5e/v6e (128 MiB) vs v7x (64 MiB)
    budget = (48 if big_vmem else 24) * 1024 * 1024
    bytes_per_row = d * (4 * itemsize + 2 * 4)

    if tile_rows is None:
        tile_rows = max(sub, budget // bytes_per_row)
    tile_rows = min(tile_rows, rows)
    if tile_rows < rows:
        tile_rows = max(sub, (tile_rows // sub) * sub)
    # Keep at least 2 grid blocks when rows allow, so both v7x TensorCores get work.
    if pl.cdiv(rows, tile_rows) < 2 and rows > sub:
        half = pl.cdiv(rows, 2)
        tile_rows = max(sub, ((half + sub - 1) // sub) * sub)

    grid_rows = pl.cdiv(rows, tile_rows)  # ragged tail handled by Pallas partial-block masking

    x2 = x.reshape(rows, d)  # metadata-only reshape, no HBM traffic
    w2 = weight.reshape(1, d).astype(jnp.float32)
    b2 = bias.reshape(1, d).astype(jnp.float32)

    footprint = tile_rows * bytes_per_row + 2 * d * 4
    vmem_limit = min(int(footprint * 1.25) + (1 << 20), int(vmem_cap * 0.85))
    vmem_limit = max(vmem_limit, 16 * 1024 * 1024)

    cost = pl.CostEstimate(
        flops=8 * rows * d,
        transcendentals=rows,
        bytes_accessed=2 * rows * d * itemsize + 2 * d * 4,
    )

    out2 = pl.pallas_call(
        functools.partial(layernorm_kernel, d_model=d),
        out_shape=jax.ShapeDtypeStruct((rows, d), x.dtype),
        grid_spec=pltpu.PrefetchScalarGridSpec(
            num_scalar_prefetch=0,
            grid=(grid_rows,),
            in_specs=[
                pl.BlockSpec((tile_rows, d), lambda i: (i, 0)),
                pl.BlockSpec((1, d), lambda i: (0, 0)),
                pl.BlockSpec((1, d), lambda i: (0, 0)),
            ],
            out_specs=pl.BlockSpec((tile_rows, d), lambda i: (i, 0)),
        ),
        compiler_params=pltpu.CompilerParams(
            dimension_semantics=("parallel",),
            vmem_limit_bytes=vmem_limit,
        ),
        cost_estimate=cost,
    )(x2, w2, b2)

    return out2.reshape(b, s, d)


if __name__ == "__main__":
    def ref_layer_norm(x, weight, bias):
        # Plain-JAX reference matching the PyTorch module: unbiased std (ddof=1), no eps.
        mean = x.mean(-1, keepdims=True)
        xc = x - mean
        var = (xc * xc).sum(-1, keepdims=True) / (x.shape[-1] - 1)
        return weight * (xc / jnp.sqrt(var)) + bias

    # Case 1: small shape (batch=2, position=8, d_model=128), auto tile sizing; the grid is
    # forced to >= 2 blocks so the pipeline / megacore path is exercised.
    batch, seq, d_model = 2, 8, 128
    key = jax.random.PRNGKey(0)
    x = jax.random.normal(key, (batch, seq, d_model), dtype=jnp.float32)
    weight = jnp.ones((d_model,), dtype=jnp.float32)   # nn.Parameter(torch.ones)
    bias = jnp.zeros((d_model,), dtype=jnp.float32)    # nn.Parameter(torch.zeros)

    out = jax.block_until_ready(layer_norm(x, weight, bias))
    ref = ref_layer_norm(x, weight, bias)
    assert jnp.allclose(out, ref, atol=1e-5, rtol=1e-5), "mismatch vs reference (case 1)"

    # Case 2: multi-step grid with a ragged tail handled purely by Pallas partial-block
    # masking (rows=120, tile=32 -> grid=4, last block 24 rows; no jnp.pad, no output slice)
    # and non-trivial affine params.
    batch2, seq2 = 3, 40
    x2 = jax.random.normal(jax.random.PRNGKey(1), (batch2, seq2, d_model), dtype=jnp.float32)
    w2 = 0.5 + jax.random.uniform(jax.random.PRNGKey(2), (d_model,), dtype=jnp.float32)
    b2 = jax.random.normal(jax.random.PRNGKey(3), (d_model,), dtype=jnp.float32)

    out2 = jax.block_until_ready(layer_norm(x2, w2, b2, tile_rows=32))
    ref2 = ref_layer_norm(x2, w2, b2)
    assert jnp.allclose(out2, ref2, atol=1e-4, rtol=1e-4), "mismatch vs reference (case 2)"

    print("KERNEL_OK")
</pallas_src>

<mosaic_0001>
module attributes {stable_mosaic.version = 11 : i64} {
  func.func @layernorm_kernel(%arg0: i32, %arg1: memref<8x128xf32, #tpu.memory_space<vmem>>, %arg2: memref<1x128xf32, #tpu.memory_space<vmem>>, %arg3: memref<1x128xf32, #tpu.memory_space<vmem>>, %arg4: memref<8x128xf32, #tpu.memory_space<vmem>>) attributes {dimension_semantics = [#tpu.dimension_semantics<parallel>], iteration_bounds = array<i64: 2>, scalar_prefetch = 0 : i64, scratch_operands = 0 : i64, tpu.core_type = #tpu.core_type<tc>, window_params = [{transform_indices = @transform_0, window_bounds = array<i64: 8, 128>}, {pipeline_mode = #tpu.pipeline_mode<synchronous>, transform_indices = @transform_1, window_bounds = array<i64: 1, 128>}, {pipeline_mode = #tpu.pipeline_mode<synchronous>, transform_indices = @transform_2, window_bounds = array<i64: 1, 128>}, {transform_indices = @transform_3, window_bounds = array<i64: 8, 128>}]} {
    %c0 = arith.constant 0 : index
    %c0_0 = arith.constant 0 : index
    %0 = vector.load %arg1[%c0, %c0_0] : memref<8x128xf32, #tpu.memory_space<vmem>>, vector<8x128xf32>
    %cst = arith.constant dense<0.000000e+00> : vector<8xf32>
    %1 = vector.multi_reduction <add>, %0, %cst [1] : vector<8x128xf32> to vector<8xf32>
    %2 = vector.shape_cast %1 : vector<8xf32> to vector<8x1xf32>
    %cst_1 = arith.constant 7.812500e-03 : f32
    %3 = vector.broadcast %cst_1 : f32 to vector<8x1xf32>
    %4 = arith.mulf %2, %3 : vector<8x1xf32>
    %5 = vector.broadcast %4 : vector<8x1xf32> to vector<8x128xf32>
    %6 = arith.subf %0, %5 : vector<8x128xf32>
    %7 = arith.mulf %6, %6 : vector<8x128xf32>
    %cst_2 = arith.constant dense<0.000000e+00> : vector<8xf32>
    %8 = vector.multi_reduction <add>, %7, %cst_2 [1] : vector<8x128xf32> to vector<8xf32>
    %9 = vector.shape_cast %8 : vector<8xf32> to vector<8x1xf32>
    %cst_3 = arith.constant 0.00787401571 : f32
    %10 = vector.broadcast %cst_3 : f32 to vector<8x1xf32>
    %11 = arith.mulf %9, %10 : vector<8x1xf32>
    %12 = math.rsqrt %11 : vector<8x1xf32>
    %c0_4 = arith.constant 0 : index
    %c0_5 = arith.constant 0 : index
    %13 = vector.load %arg2[%c0_4, %c0_5] : memref<1x128xf32, #tpu.memory_space<vmem>>, vector<1x128xf32>
    %14 = vector.broadcast %12 : vector<8x1xf32> to vector<8x128xf32>
    %15 = arith.mulf %6, %14 : vector<8x128xf32>
    %16 = vector.broadcast %13 : vector<1x128xf32> to vector<8x128xf32>
    %17 = arith.mulf %16, %15 : vector<8x128xf32>
    %c0_6 = arith.constant 0 : index
    %c0_7 = arith.constant 0 : index
    %18 = vector.load %arg3[%c0_6, %c0_7] : memref<1x128xf32, #tpu.memory_space<vmem>>, vector<1x128xf32>
    %19 = vector.broadcast %18 : vector<1x128xf32> to vector<8x128xf32>
    %20 = arith.addf %17, %19 : vector<8x128xf32>
    %c0_8 = arith.constant 0 : index
    %c0_9 = arith.constant 0 : index
    %21 = vector.load %arg4[%c0_8, %c0_9] : memref<8x128xf32, #tpu.memory_space<vmem>>, vector<8x128xf32>
    tpu.vector_store %arg4[%c0_8, %c0_9], %20 {strides = array<i32>} : memref<8x128xf32, #tpu.memory_space<vmem>>, vector<8x128xf32>,
    return
  }
  func.func @transform_0(%arg0: i32) -> (i32, i32) {
    %c0_i32 = arith.constant 0 : i32
    %c0_i32_0 = arith.constant 0 : i32
    return %arg0, %c0_i32 : i32, i32
  }
  func.func @transform_1(%arg0: i32) -> (i32, i32) {
    %c0_i32 = arith.constant 0 : i32
    %c0_i32_0 = arith.constant 0 : i32
    %c0_i32_1 = arith.constant 0 : i32
    return %c0_i32, %c0_i32_0 : i32, i32
  }
  func.func @transform_2(%arg0: i32) -> (i32, i32) {
    %c0_i32 = arith.constant 0 : i32
    %c0_i32_0 = arith.constant 0 : i32
    %c0_i32_1 = arith.constant 0 : i32
    return %c0_i32, %c0_i32_0 : i32, i32
  }
  func.func @transform_3(%arg0: i32) -> (i32, i32) {
    %c0_i32 = arith.constant 0 : i32
    %c0_i32_0 = arith.constant 0 : i32
    return %arg0, %c0_i32 : i32, i32
  }
}

</mosaic_0001>

<llo_original>
// kernel: tpu_custom_call.1
$region0: #{tpu_custom_call.1}
  #allocation0 [shape = 'u32[]', space=smem, size = 0x4, offset = 0x4, fixed_abs, tag = 'smem constant byte address 0x4 - core index']
  #allocation1 [shape = 'u32[144,128]{1,0:T(1,128)}', space=vmem, size = 0x12000, scoped, tag = 'internal scratch']
  %s0 = inlined_call_operand.hbm [shape: f32[16,128], index: 0, kind: input, shape index: {}]
  %s1 = inlined_call_operand.vmem [shape: f32[1,128], index: 1, kind: input, shape index: {}]
  %s2 = inlined_call_operand.vmem [shape: f32[1,128], index: 2, kind: input, shape index: {}]
  %s3 = inlined_call_operand.hbm [shape: f32[16,128], index: 3, kind: output, shape index: {}]
  %s4 = sld [smem:[#allocation0]]
  $region49: #{tpu_custom_call.1} parent=0
    _
  %s6 = ssub.s32 1, %s4
  %s7 = scalar_select 0, %s6, %s4
  $region1: #{tpu_custom_call.1} parent=0
    #allocation2 [shape = 'u8[8192]{0}', space=vmem, size = 0x2000, scoped, tag = 'input window, operand 0']
    #allocation3 [shape = 's32[2]{0}', space=sflag, size = 0x8, scoped, tag = 'scoped memory for tpu_custom_call.1']
    #allocation4 [shape = 's32[2]{0}', space=sflag, size = 0x8, scoped, tag = 'scoped memory for tpu_custom_call.1']
    #allocation5 [shape = 'u8[8192]{0}', space=vmem, size = 0x2000, scoped, tag = 'output window, operand 0']
    %8 = vsyncpa [#allocation3], 0
    %s9 = scalar_lea.sflag [#allocation3], 1
    %10 = vsyncpa %s9, 0
    %11 = vsyncpa [#allocation4], 0
    %s12 = scalar_lea.sflag [#allocation4], 1
    %13 = vsyncpa %s12, 0
    loop: start=0, step=1, limit=4
    $region2: #{tpu_custom_call.1} parent=1 // loop_pre_header
      _
    $region3: #{tpu_custom_call.1} parent=1 // loop_header
      %s15 = sphi 0, %s19
      %p16 = scmp.ge.s32.totalorder %s15, 4
      %s25 = sphi 0, %s27
      %s28 = sphi 0, %s25
      %s29 = sphi 0, %s28
      %s45 = sphi 0, %s29
      %s49 = sphi 0, %s49
      %s51 = sphi 0, %s49
      %s52 = sphi 0, %s51
      %s66 = sphi 0, %s52
      %s70 = sphi 0, %s70
      %s72 = sphi 0, %s70
      %s73 = sphi 0, %s72
      %s87 = sphi 0, %s73
      %s93 = sphi 0, %s95
      %s96 = sphi 0, %s93
      %s97 = sphi 0, %s96
      %s113 = sphi 0, %s97
    $region4: #{tpu_custom_call.1} parent=1 // loop_header_branch
      %18 = sbr.rel (%p16) target = $region8
    $region5: #{tpu_custom_call.1} parent=1 // loop_body
      %s20 = ssub.s32 %s15, 1
      %s21 = ssub.s32 %s15, 2
      %s22 = sadd.s32 %s15, 1
      %s23 = ssub.s32 %s15, %s22
      %p24 = scmp.eq.s32.totalorder %s23, 0
      %s26 = sadd.s32 %s25, 1
      %s27 = scalar_select %p24, %s25, %s26
      %p30 = pneg %p24
      %p31 = scmp.eq.s32.totalorder %s15, 1
      %p32 = por %p30, %p31
      %p33 = scmp.ne.s32.totalorder %s25, %s28
      %p34 = scmp.eq.s32.totalorder %s15, 0
      %p35 = por %p33, %p34
      %p36 = scmp.ne.s32.totalorder %s25, %s28
      %p37 = scmp.eq.s32.totalorder %s20, 1
      %p38 = por %p36, %p37
      %p39 = scmp.ne.s32.totalorder %s28, %s29
      %p40 = scmp.eq.s32.totalorder %s20, 0
      %p41 = por %p39, %p40
      %p42 = scmp.ne.s32.totalorder %s28, %s29
      %p43 = scmp.eq.s32.totalorder %s21, 1
      %p44 = por %p42, %p43
      %p46 = scmp.ne.s32.totalorder %s29, %s45
      %p47 = scmp.eq.s32.totalorder %s21, 0
      %p48 = por %p46, %p47
      %s50 = sadd.s32 %s49, 1
      %p53 = scmp.eq.s32.totalorder %s15, 1
      %p54 = scmp.ne.s32.totalorder %s49, %s51
      %p55 = scmp.eq.s32.totalorder %s15, 0
      %p56 = por %p54, %p55
      %p57 = scmp.ne.s32.totalorder %s49, %s51
      %p58 = scmp.eq.s32.totalorder %s20, 1
      %p59 = por %p57, %p58
      %p60 = scmp.ne.s32.totalorder %s51, %s52
      %p61 = scmp.eq.s32.totalorder %s20, 0
      %p62 = por %p60, %p61
      %p63 = scmp.ne.s32.totalorder %s51, %s52
      %p64 = scmp.eq.s32.totalorder %s21, 1
      %p65 = por %p63, %p64
      %p67 = scmp.ne.s32.totalorder %s52, %s66
      %p68 = scmp.eq.s32.totalorder %s21, 0
      %p69 = por %p67, %p68
      %s71 = sadd.s32 %s70, 1
      %p74 = scmp.eq.s32.totalorder %s15, 1
      %p75 = scmp.ne.s32.totalorder %s70, %s72
      %p76 = scmp.eq.s32.totalorder %s15, 0
      %p77 = por %p75, %p76
      %p78 = scmp.ne.s32.totalorder %s70, %s72
      %p79 = scmp.eq.s32.totalorder %s20, 1
      %p80 = por %p78, %p79
      %p81 = scmp.ne.s32.totalorder %s72, %s73
      %p82 = scmp.eq.s32.totalorder %s20, 0
      %p83 = por %p81, %p82
      %p84 = scmp.ne.s32.totalorder %s72, %s73
      %p85 = scmp.eq.s32.totalorder %s21, 1
      %p86 = por %p84, %p85
      %p88 = scmp.ne.s32.totalorder %s73, %s87
      %p89 = scmp.eq.s32.totalorder %s21, 0
      %p90 = por %p88, %p89
      %s91 = ssub.s32 %s15, %s22
      %p92 = scmp.eq.s32.totalorder %s91, 0
      %s94 = sadd.s32 %s93, 1
      %s95 = scalar_select %p92, %s93, %s94
      %p98 = pneg %p92
      %p99 = scmp.eq.s32.totalorder %s15, 1
      %p100 = por %p98, %p99
      %p101 = scmp.ne.s32.totalorder %s93, %s96
      %p102 = scmp.eq.s32.totalorder %s15, 0
      %p103 = por %p101, %p102
      %p104 = scmp.ne.s32.totalorder %s93, %s96
      %p105 = scmp.eq.s32.totalorder %s20, 1
      %p106 = por %p104, %p105
      %p107 = scmp.ne.s32.totalorder %s96, %s97
      %p108 = scmp.eq.s32.totalorder %s20, 0
      %p109 = por %p107, %p108
      %p110 = scmp.ne.s32.totalorder %s96, %s97
      %p111 = scmp.eq.s32.totalorder %s21, 1
      %p112 = por %p110, %p111
      %p114 = scmp.ne.s32.totalorder %s97, %s113
      %p115 = scmp.eq.s32.totalorder %s21, 0
      %p116 = por %p114, %p115
      %p117 = scmp.le.s32.totalorder 1, %s15
      %p118 = scmp.lt.s32.totalorder %s15, 3
      %p119 = pnand %p117, %p118
      %p120 = pneg %p119
      // Predicated region
      $region9: #{tpu_custom_call.1} parent=5 // pred_check
        _
      $region10: #{tpu_custom_call.1} parent=5 // pred_check_branch
        %122 = sbr.rel (%p119) target = $region12
      $region11: #{tpu_custom_call.1} parent=5 // pred_region
        %s123 = ssub.s32 %s15, 1
        // Predicated region
        $region13: #{tpu_custom_call.1} parent=11 // pred_check
          %p124 = pneg %p62
        $region14: #{tpu_custom_call.1} parent=11 // pred_check_branch
          %126 = sbr.rel (%p124) target = $region16
        $region15: #{tpu_custom_call.1} parent=11 // pred_region
          _
        $region16: #{tpu_custom_call.1} parent=11 // pred_fallthru
          _
        // Predicated region
        $region17: #{tpu_custom_call.1} parent=11 // pred_check
          %p127 = pneg %p83
        $region18: #{tpu_custom_call.1} parent=11 // pred_check_branch
          %129 = sbr.rel (%p127) target = $region20
        $region19: #{tpu_custom_call.1} parent=11 // pred_region
          _
        $region20: #{tpu_custom_call.1} parent=11 // pred_fallthru
          _
      $region12: #{tpu_custom_call.1} parent=5 // pred_fallthru
        _
      %p130 = scmp.lt.s32.totalorder %s15, 2
      // Predicated region
      $region21: #{tpu_custom_call.1} parent=5 // pred_check
        %p131 = pneg %p130
      $region22: #{tpu_custom_call.1} parent=5 // pred_check_branch
        %133 = sbr.rel (%p131) target = $region24
      $region23: #{tpu_custom_call.1} parent=5 // pred_region
        // Predicated region
        $region25: #{tpu_custom_call.1} parent=23 // pred_check
          %p134 = pneg %p35
        $region26: #{tpu_custom_call.1} parent=23 // pred_check_branch
          %136 = sbr.rel (%p134) target = $region28
        $region27: #{tpu_custom_call.1} parent=23 // pred_region
          %s137 = sand.u32 %s25, 1
          %s138 = scalar_lea.sflag [#allocation3], %s137
          %s139 = sand.u32 %s25, 1
          %s140 = smul.addr %s139, 8
          %s141 = scalar_lea.vmem [#allocation2], %s140
          %s143 = ssub.s32 128, 128
          %144 = vsyncadd %s138, %s143
          %s145 = smul.addr %s15, 128
          %s146 = scalar_lea.hbm %s0, %s145
          %s148 = sshll.u32 %s141, 4
          %s149 = int_to_ptr.vmem [resolvable:$true] %s148
          %151 = dma.hbm_to_vmem [thread:$0]  %s146, 128, %s149, %s138
        $region28: #{tpu_custom_call.1} parent=23 // pred_fallthru
          _
      $region24: #{tpu_custom_call.1} parent=5 // pred_fallthru
        _
      %p152 = scmp.le.s32.totalorder 1, %s15
      %p153 = scmp.lt.s32.totalorder %s15, 3
      %p154 = pnand %p152, %p153
      %p155 = pneg %p154
      // Predicated region
      $region29: #{tpu_custom_call.1} parent=5 // pred_check
        _
      $region30: #{tpu_custom_call.1} parent=5 // pred_check_branch
        %157 = sbr.rel (%p154) target = $region32
      $region31: #{tpu_custom_call.1} parent=5 // pred_region
        %s158 = ssub.s32 %s15, 1
        %s159 = sand.u32 %s28, 1
        %s160 = scalar_lea.sflag [#allocation3], %s159
        %s161 = sand.u32 %s28, 1
        %s162 = smul.addr %s161, 8
        %s163 = scalar_lea.vmem [#allocation2], %s162
        // Predicated region
        $region33: #{tpu_custom_call.1} parent=31 // pred_check
          %p164 = pneg %p41
        $region34: #{tpu_custom_call.1} parent=31 // pred_check_branch
          %166 = sbr.rel (%p164) target = $region36
        $region35: #{tpu_custom_call.1} parent=31 // pred_region
          %167 = dma.done %s160, 128
        $region36: #{tpu_custom_call.1} parent=31 // pred_fallthru
          _
        %s168 = sand.u32 %s28, 1
        %s169 = scalar_lea.sflag [#allocation3], %s168
        %s170 = sand.u32 %s28, 1
        %s171 = smul.addr %s170, 8
        %s172 = scalar_lea.vmem [#allocation2], %s171
        %p173 = pneg %p41
        %p174 = pneg %p38
        %p175 = pneg %p62
        %p176 = pneg %p59
        %p177 = pneg %p83
        %p178 = pneg %p80
        %p179 = pneg %p109
        %p180 = pneg %p106
        %s181 = sand.u32 %s96, 1
        %s182 = scalar_lea.sflag [#allocation4], %s181
        %s183 = sand.u32 %s96, 1
        %s184 = smul.addr %s183, 8
        %s185 = scalar_lea.vmem [#allocation5], %s184
        %v186 = vld [vmem:[%s163] sm:$0xff]
        %187 = vadd.xlane.f32.xlu0 %v186
        %v188 = vpop.xlane.xlu0 %187
        %v189 = vmul.f32 %v188, 0.0078125
        %v190 = vsub.f32 %v186, %v189
        %v191 = vmul.f32 %v190, %v190
        %192 = vadd.xlane.f32.xlu0 %v191
        %v193 = vpop.xlane.xlu0 %192
        %v194 = vmul.f32 %v193, 0.007874016
        %v195 = vrsqrt.pop %v194
        %v196 = vld [vmem:[%s1] sm:$0x1]
        %v197 = vmul.f32 %v190, %v195
        %v199 = vlaneseq
        %v200 = vshrl.u32 %v199, 7
        %v201 = vsub.s32 0, %v200
        %v202 = vrot.slane %v196, %v201
        %v204 = vmul.f32 %v202, %v197
        %v205 = vld [vmem:[%s2] sm:$0x1]
        %v207 = vlaneseq
        %v208 = vshrl.u32 %v207, 7
        %v209 = vsub.s32 0, %v208
        %v210 = vrot.slane %v205, %v209
        %v212 = vadd.f32 %v204, %v210
        %213 = vst [vmem:[%s185] sm:$0xff] %v212
        %s214 = sand.u32 %s96, 1
        %s215 = scalar_lea.sflag [#allocation4], %s214
        %s216 = sand.u32 %s96, 1
        %s217 = smul.addr %s216, 8
        %s218 = scalar_lea.vmem [#allocation5], %s217
        // Predicated region
        $region37: #{tpu_custom_call.1} parent=31 // pred_check
          %p219 = pneg %p106
        $region38: #{tpu_custom_call.1} parent=31 // pred_check_branch
          %221 = sbr.rel (%p219) target = $region40
        $region39: #{tpu_custom_call.1} parent=31 // pred_region
          %s223 = ssub.s32 128, 128
          %224 = vsyncadd %s215, %s223
          %s225 = smul.addr %s20, 128
          %s226 = scalar_lea.hbm %s3, %s225
          %s228 = sshll.u32 %s218, 4
          %s229 = int_to_ptr.vmem [resolvable:$true] %s228
          %231 = dma.vmem_to_hbm [thread:$0]  %s229, 128, %s226, %s215
        $region40: #{tpu_custom_call.1} parent=31 // pred_fallthru
          _
      $region32: #{tpu_custom_call.1} parent=5 // pred_fallthru
        _
      %p232 = scmp.le.s32.totalorder 2, %s15
      // Predicated region
      $region41: #{tpu_custom_call.1} parent=5 // pred_check
        %p233 = pneg %p232
      $region42: #{tpu_custom_call.1} parent=5 // pred_check_branch
        %235 = sbr.rel (%p233) target = $region44
      $region43: #{tpu_custom_call.1} parent=5 // pred_region
        %s236 = ssub.s32 %s15, 2
        // Predicated region
        $region45: #{tpu_custom_call.1} parent=43 // pred_check
          %p237 = pneg %p112
        $region46: #{tpu_custom_call.1} parent=43 // pred_check_branch
          %239 = sbr.rel (%p237) target = $region48
        $region47: #{tpu_custom_call.1} parent=43 // pred_region
          %s240 = sand.u32 %s97, 1
          %s241 = scalar_lea.sflag [#allocation4], %s240
          %s242 = sand.u32 %s97, 1
          %s243 = smul.addr %s242, 8
          %s244 = scalar_lea.vmem [#allocation5], %s243
          %245 = dma.done %s241, 128
        $region48: #{tpu_custom_call.1} parent=43 // pred_fallthru
          _
      $region44: #{tpu_custom_call.1} parent=5 // pred_fallthru
        _
    $region6: #{tpu_custom_call.1} parent=1 // loop_footer
      %s19 = sadd.s32 1, %s15
    $region7: #{tpu_custom_call.1} parent=1 // loop_footer_branch
      %14 = sbr.rel target = $region3
    $region8: #{tpu_custom_call.1} parent=1 // loop_exit
      _
    %246 = vsyncpa [#allocation3], 1
    %s247 = scalar_lea.sflag [#allocation3], 1
    %248 = vsyncpa %s247, 1
    %249 = vsyncpa [#allocation4], 1
    %s250 = scalar_lea.sflag [#allocation4], 1
    %251 = vsyncpa %s250, 1

</llo_original>
